<compile_context>
chip_gen: v6e
topology: v6e:2x2x1
jax: 0.10.0
libtpu: 0.0.40
codegen_flags: <defaults>
</compile_context>

<pallas_src>
import functools

import jax
import jax.numpy as jnp
from jax.experimental import pallas as pl
from jax.experimental.pallas import tpu as pltpu

LANE = 128
SUBLANE = 8


def _standardize_kernel(x_ref, o_ref, *, n_valid):
    # x_ref block: (B, r, 128) lane-dense, or (B, chw) with a ragged lane tail
    # that Mosaic masks.  The logical per-sample element count is exactly
    # n_valid in both cases, so no masking / correction is required here.
    x = x_ref[...].astype(jnp.float32)
    red_axes = tuple(range(1, x.ndim))

    s = jnp.sum(x, axis=red_axes, keepdims=True)
    mean = s * (1.0 / n_valid)

    centered = x - mean
    # torch.std default is unbiased (ddof=1).  Guard the degenerate
    # C*H*W == 1 case (torch returns NaN there; we return ~0 instead).
    denom = max(n_valid - 1, 1)
    var = jnp.sum(centered * centered, axis=red_axes, keepdims=True) * (1.0 / denom)
    std = jnp.sqrt(var) + 1e-5

    # Exact reciprocal on a tiny per-sample tensor, then a single vector
    # multiply over the tile (no per-element divide on the VPU path).
    inv = pl.reciprocal(std)
    o_ref[...] = (centered * inv).astype(o_ref.dtype)


def _vmem_capacity_bytes():
    try:
        return int(pltpu.get_tpu_info().vmem_capacity_bytes)
    except Exception:
        return 64 * 1024 * 1024  # conservative default (v7x per-core VMEM)


def standardize(x):
    N, C, H, W = x.shape
    chw = C * H * W
    itemsize = jnp.dtype(x.dtype).itemsize

    vmem_cap = _vmem_capacity_bytes()
    # Headroom for Mosaic-internal scratch, semaphores and layout padding.
    vmem_usable = max(8 * 1024 * 1024, (vmem_cap * 3) // 4)

    if chw % LANE == 0:
        # Lane-dense view (free reshape of contiguous NCHW): (N, r, 128).
        r = chw // LANE
        xf = x.reshape(N, r, LANE)
        tail_block = (r, LANE)
        index_map = lambda i: (i, 0, 0)
        sample_padded_elems = pl.cdiv(r, SUBLANE) * SUBLANE * LANE
        row_multiple = 1
    else:
        # Exact 2-D view (N, chw); full-row blocks so only the final lane
        # group is compiler-masked -- no HBM pad/slice copies.
        xf = x.reshape(N, chw)
        tail_block = (chw,)
        index_map = lambda i: (i, 0)
        sample_padded_elems = pl.cdiv(chw, LANE) * LANE
        # Second-to-last block dim must be a multiple of 8 or the full dim.
        row_multiple = SUBLANE if N > SUBLANE else N

    # Per-sample VMEM footprint: double-buffered input + output (io dtype)
    # plus ~3 f32 temporaries (upcast copy, centered, centered^2).
    per_row_bytes = sample_padded_elems * (4 * itemsize + 3 * 4)

    # Keep >= 4 grid steps when the batch allows (>= 2 per TensorCore on
    # dual-TC chips) so per-core DMA pipelining has something to overlap.
    MIN_STEPS = 4
    target_steps = min(MIN_STEPS, N)
    b_budget = max(1, vmem_usable // per_row_bytes)
    b_steps = max(1, N // target_steps)
    b = max(1, min(b_budget, b_steps, N))
    if row_multiple > 1:
        if N <= SUBLANE:
            b = N
        else:
            b = max(SUBLANE, (b // SUBLANE) * SUBLANE)
    b = max(1, min(b, N))

    block_elems = b * sample_padded_elems
    vmem_needed = 4 * block_elems * itemsize + 3 * block_elems * 4 + (2 << 20)
    # Clamp below the chip's physical VMEM (never request > v7x's 64 MiB).
    vmem_limit = int(min(max(vmem_needed, 32 * 1024 * 1024),
                         vmem_cap - 2 * 1024 * 1024))
    # TODO(synk): for a single sample whose block footprint exceeds physical
    # VMEM, add a chunked two-pass reduction over an inner 'arbitrary' grid
    # axis with per-sample scratch accumulators.

    kernel = functools.partial(_standardize_kernel, n_valid=chw)
    block_shape = (b,) + tail_block
    grid = (pl.cdiv(N, b),)

    out = pl.pallas_call(
        kernel,
        out_shape=jax.ShapeDtypeStruct(xf.shape, x.dtype),
        grid_spec=pltpu.PrefetchScalarGridSpec(
            num_scalar_prefetch=0,
            grid=grid,
            in_specs=[pl.BlockSpec(block_shape, index_map)],
            out_specs=pl.BlockSpec(block_shape, index_map),
        ),
        compiler_params=pltpu.CompilerParams(
            dimension_semantics=("parallel",),
            vmem_limit_bytes=vmem_limit,
        ),
    )(xf)

    return out.reshape(N, C, H, W)


def standardize_ref(x):
    # Pure-JAX reference replicating the PyTorch module.
    N = x.shape[0]
    xv = x.reshape(N, -1).astype(jnp.float32)
    mean = jnp.mean(xv, axis=1).reshape(N, 1, 1, 1)
    std = 1e-5 + jnp.std(xv, axis=1, ddof=1).reshape(N, 1, 1, 1)
    return ((x - mean) / std).astype(x.dtype)


if __name__ == "__main__":
    key = jax.random.PRNGKey(0)

    # Main path: C*H*W % 128 == 0 -> lane-dense (N, r, 128) tiling.
    x = jax.random.normal(key, (2, 4, 16, 16), dtype=jnp.float32) * 3.0 + 1.5
    out = jax.block_until_ready(standardize(x))
    ref = standardize_ref(x)
    assert out.shape == x.shape and out.dtype == x.dtype
    assert jnp.max(jnp.abs(out - ref)) < 1e-4

    # Fallback path: C*H*W % 128 != 0 -> exact (N, chw) blocks, no pad/slice.
    x2 = jax.random.normal(jax.random.PRNGKey(1), (2, 3, 5, 7),
                           dtype=jnp.float32) * 2.0 - 0.7
    out2 = jax.block_until_ready(standardize(x2))
    ref2 = standardize_ref(x2)
    assert out2.shape == x2.shape and out2.dtype == x2.dtype
    assert jnp.max(jnp.abs(out2 - ref2)) < 1e-4

    print("KERNEL_OK")
</pallas_src>

<mosaic_0001>
module attributes {stable_mosaic.version = 11 : i64} {
  func.func @_standardize_kernel(%arg0: i32, %arg1: memref<1x8x128xf32, #tpu.memory_space<vmem>>, %arg2: memref<1x8x128xf32, #tpu.memory_space<vmem>>) attributes {dimension_semantics = [#tpu.dimension_semantics<parallel>], iteration_bounds = array<i64: 2>, scalar_prefetch = 0 : i64, scratch_operands = 0 : i64, tpu.core_type = #tpu.core_type<tc>, window_params = [{transform_indices = @transform_0, window_bounds = array<i64: 1, 8, 128>}, {transform_indices = @transform_1, window_bounds = array<i64: 1, 8, 128>}]} {
    %c0 = arith.constant 0 : index
    %c0_0 = arith.constant 0 : index
    %c0_1 = arith.constant 0 : index
    %0 = vector.load %arg1[%c0, %c0_0, %c0_1] : memref<1x8x128xf32, #tpu.memory_space<vmem>>, vector<1x8x128xf32>
    %cst = arith.constant dense<0.000000e+00> : vector<1xf32>
    %1 = vector.multi_reduction <add>, %0, %cst [1, 2] : vector<1x8x128xf32> to vector<1xf32>
    %2 = vector.shape_cast %1 : vector<1xf32> to vector<1x1x1xf32>
    %cst_2 = arith.constant 9.765625E-4 : f32
    %3 = vector.broadcast %cst_2 : f32 to vector<1x1x1xf32>
    %4 = arith.mulf %2, %3 : vector<1x1x1xf32>
    %5 = vector.broadcast %4 : vector<1x1x1xf32> to vector<1x8x128xf32>
    %6 = arith.subf %0, %5 : vector<1x8x128xf32>
    %7 = arith.mulf %6, %6 : vector<1x8x128xf32>
    %cst_3 = arith.constant dense<0.000000e+00> : vector<1xf32>
    %8 = vector.multi_reduction <add>, %7, %cst_3 [1, 2] : vector<1x8x128xf32> to vector<1xf32>
    %9 = vector.shape_cast %8 : vector<1xf32> to vector<1x1x1xf32>
    %cst_4 = arith.constant 9.77517105E-4 : f32
    %10 = vector.broadcast %cst_4 : f32 to vector<1x1x1xf32>
    %11 = arith.mulf %9, %10 : vector<1x1x1xf32>
    %12 = math.sqrt %11 : vector<1x1x1xf32>
    %cst_5 = arith.constant 9.99999974E-6 : f32
    %13 = vector.broadcast %cst_5 : f32 to vector<1x1x1xf32>
    %14 = arith.addf %12, %13 : vector<1x1x1xf32>
    %15 = tpu.reciprocal %14 : vector<1x1x1xf32> -> vector<1x1x1xf32>
    %16 = vector.broadcast %15 : vector<1x1x1xf32> to vector<1x8x128xf32>
    %17 = arith.mulf %6, %16 : vector<1x8x128xf32>
    %c0_6 = arith.constant 0 : index
    %c0_7 = arith.constant 0 : index
    %c0_8 = arith.constant 0 : index
    %18 = vector.load %arg2[%c0_6, %c0_7, %c0_8] : memref<1x8x128xf32, #tpu.memory_space<vmem>>, vector<1x8x128xf32>
    tpu.vector_store %arg2[%c0_6, %c0_7, %c0_8], %17 {strides = array<i32>} : memref<1x8x128xf32, #tpu.memory_space<vmem>>, vector<1x8x128xf32>,
    return
  }
  func.func @transform_0(%arg0: i32) -> (i32, i32, i32) {
    %c0_i32 = arith.constant 0 : i32
    %c0_i32_0 = arith.constant 0 : i32
    %c0_i32_1 = arith.constant 0 : i32
    return %arg0, %c0_i32, %c0_i32_0 : i32, i32, i32
  }
  func.func @transform_1(%arg0: i32) -> (i32, i32, i32) {
    %c0_i32 = arith.constant 0 : i32
    %c0_i32_0 = arith.constant 0 : i32
    %c0_i32_1 = arith.constant 0 : i32
    return %arg0, %c0_i32, %c0_i32_0 : i32, i32, i32
  }
}

</mosaic_0001>

<llo_original>
// kernel: tpu_custom_call.1
$region0: #{tpu_custom_call.1}
  #allocation0 [shape = 'u32[]', space=smem, size = 0x4, offset = 0x4, fixed_abs, tag = 'smem constant byte address 0x4 - core index']
  #allocation1 [shape = 'u32[144,128]{1,0:T(1,128)}', space=vmem, size = 0x12000, scoped, tag = 'internal scratch']
  %s0 = inlined_call_operand.hbm [shape: f32[2,8,128], index: 0, kind: input, shape index: {}]
  %s1 = inlined_call_operand.hbm [shape: f32[2,8,128], index: 1, kind: output, shape index: {}]
  %s2 = sld [smem:[#allocation0]]
  $region41: #{tpu_custom_call.1} parent=0
    _
  %s4 = ssub.s32 1, %s2
  %s5 = scalar_select 0, %s4, %s2
  $region1: #{tpu_custom_call.1} parent=0
    #allocation2 [shape = 'u8[8192]{0}', space=vmem, size = 0x2000, scoped, tag = 'input window, operand 0']
    #allocation3 [shape = 's32[2]{0}', space=sflag, size = 0x8, scoped, tag = 'scoped memory for tpu_custom_call.1']
    #allocation4 [shape = 's32[2]{0}', space=sflag, size = 0x8, scoped, tag = 'scoped memory for tpu_custom_call.1']
    #allocation5 [shape = 'u8[8192]{0}', space=vmem, size = 0x2000, scoped, tag = 'output window, operand 0']
    %6 = vsyncpa [#allocation3], 0
    %s7 = scalar_lea.sflag [#allocation3], 1
    %8 = vsyncpa %s7, 0
    %9 = vsyncpa [#allocation4], 0
    %s10 = scalar_lea.sflag [#allocation4], 1
    %11 = vsyncpa %s10, 0
    loop: start=0, step=1, limit=4
    $region2: #{tpu_custom_call.1} parent=1 // loop_pre_header
      _
    $region3: #{tpu_custom_call.1} parent=1 // loop_header
      %s13 = sphi 0, %s17
      %p14 = scmp.ge.s32.totalorder %s13, 4
      %s23 = sphi 0, %s25
      %s26 = sphi 0, %s23
      %s27 = sphi 0, %s26
      %s43 = sphi 0, %s27
      %s49 = sphi 0, %s51
      %s52 = sphi 0, %s49
      %s53 = sphi 0, %s52
      %s69 = sphi 0, %s53
    $region4: #{tpu_custom_call.1} parent=1 // loop_header_branch
      %16 = sbr.rel (%p14) target = $region8
    $region5: #{tpu_custom_call.1} parent=1 // loop_body
      %s18 = ssub.s32 %s13, 1
      %s19 = ssub.s32 %s13, 2
      %s20 = sadd.s32 %s13, 1
      %s21 = ssub.s32 %s13, %s20
      %p22 = scmp.eq.s32.totalorder %s21, 0
      %s24 = sadd.s32 %s23, 1
      %s25 = scalar_select %p22, %s23, %s24
      %p28 = pneg %p22
      %p29 = scmp.eq.s32.totalorder %s13, 1
      %p30 = por %p28, %p29
      %p31 = scmp.ne.s32.totalorder %s23, %s26
      %p32 = scmp.eq.s32.totalorder %s13, 0
      %p33 = por %p31, %p32
      %p34 = scmp.ne.s32.totalorder %s23, %s26
      %p35 = scmp.eq.s32.totalorder %s18, 1
      %p36 = por %p34, %p35
      %p37 = scmp.ne.s32.totalorder %s26, %s27
      %p38 = scmp.eq.s32.totalorder %s18, 0
      %p39 = por %p37, %p38
      %p40 = scmp.ne.s32.totalorder %s26, %s27
      %p41 = scmp.eq.s32.totalorder %s19, 1
      %p42 = por %p40, %p41
      %p44 = scmp.ne.s32.totalorder %s27, %s43
      %p45 = scmp.eq.s32.totalorder %s19, 0
      %p46 = por %p44, %p45
      %s47 = ssub.s32 %s13, %s20
      %p48 = scmp.eq.s32.totalorder %s47, 0
      %s50 = sadd.s32 %s49, 1
      %s51 = scalar_select %p48, %s49, %s50
      %p54 = pneg %p48
      %p55 = scmp.eq.s32.totalorder %s13, 1
      %p56 = por %p54, %p55
      %p57 = scmp.ne.s32.totalorder %s49, %s52
      %p58 = scmp.eq.s32.totalorder %s13, 0
      %p59 = por %p57, %p58
      %p60 = scmp.ne.s32.totalorder %s49, %s52
      %p61 = scmp.eq.s32.totalorder %s18, 1
      %p62 = por %p60, %p61
      %p63 = scmp.ne.s32.totalorder %s52, %s53
      %p64 = scmp.eq.s32.totalorder %s18, 0
      %p65 = por %p63, %p64
      %p66 = scmp.ne.s32.totalorder %s52, %s53
      %p67 = scmp.eq.s32.totalorder %s19, 1
      %p68 = por %p66, %p67
      %p70 = scmp.ne.s32.totalorder %s53, %s69
      %p71 = scmp.eq.s32.totalorder %s19, 0
      %p72 = por %p70, %p71
      %p73 = scmp.le.s32.totalorder 1, %s13
      %p74 = scmp.lt.s32.totalorder %s13, 3
      %p75 = pnand %p73, %p74
      %p76 = pneg %p75
      // Predicated region
      $region9: #{tpu_custom_call.1} parent=5 // pred_check
        _
      $region10: #{tpu_custom_call.1} parent=5 // pred_check_branch
        %78 = sbr.rel (%p75) target = $region12
      $region11: #{tpu_custom_call.1} parent=5 // pred_region
        %s79 = ssub.s32 %s13, 1
      $region12: #{tpu_custom_call.1} parent=5 // pred_fallthru
        _
      %p80 = scmp.lt.s32.totalorder %s13, 2
      // Predicated region
      $region13: #{tpu_custom_call.1} parent=5 // pred_check
        %p81 = pneg %p80
      $region14: #{tpu_custom_call.1} parent=5 // pred_check_branch
        %83 = sbr.rel (%p81) target = $region16
      $region15: #{tpu_custom_call.1} parent=5 // pred_region
        // Predicated region
        $region17: #{tpu_custom_call.1} parent=15 // pred_check
          %p84 = pneg %p33
        $region18: #{tpu_custom_call.1} parent=15 // pred_check_branch
          %86 = sbr.rel (%p84) target = $region20
        $region19: #{tpu_custom_call.1} parent=15 // pred_region
          %s87 = sand.u32 %s23, 1
          %s88 = scalar_lea.sflag [#allocation3], %s87
          %s89 = sand.u32 %s23, 1
          %s90 = smul.addr %s89, 8
          %s91 = scalar_lea.vmem [#allocation2], %s90
          %s93 = ssub.s32 128, 128
          %94 = vsyncadd %s88, %s93
          %s95 = smul.addr %s13, 128
          %s96 = scalar_lea.hbm %s0, %s95
          %s98 = sshll.u32 %s91, 4
          %s99 = int_to_ptr.vmem [resolvable:$true] %s98
          %101 = dma.hbm_to_vmem [thread:$0]  %s96, 128, %s99, %s88
        $region20: #{tpu_custom_call.1} parent=15 // pred_fallthru
          _
      $region16: #{tpu_custom_call.1} parent=5 // pred_fallthru
        _
      %p102 = scmp.le.s32.totalorder 1, %s13
      %p103 = scmp.lt.s32.totalorder %s13, 3
      %p104 = pnand %p102, %p103
      %p105 = pneg %p104
      // Predicated region
      $region21: #{tpu_custom_call.1} parent=5 // pred_check
        _
      $region22: #{tpu_custom_call.1} parent=5 // pred_check_branch
        %107 = sbr.rel (%p104) target = $region24
      $region23: #{tpu_custom_call.1} parent=5 // pred_region
        %s108 = ssub.s32 %s13, 1
        %s109 = sand.u32 %s26, 1
        %s110 = scalar_lea.sflag [#allocation3], %s109
        %s111 = sand.u32 %s26, 1
        %s112 = smul.addr %s111, 8
        %s113 = scalar_lea.vmem [#allocation2], %s112
        // Predicated region
        $region25: #{tpu_custom_call.1} parent=23 // pred_check
          %p114 = pneg %p39
        $region26: #{tpu_custom_call.1} parent=23 // pred_check_branch
          %116 = sbr.rel (%p114) target = $region28
        $region27: #{tpu_custom_call.1} parent=23 // pred_region
          %117 = dma.done %s110, 128
        $region28: #{tpu_custom_call.1} parent=23 // pred_fallthru
          _
        %s118 = sand.u32 %s26, 1
        %s119 = scalar_lea.sflag [#allocation3], %s118
        %s120 = sand.u32 %s26, 1
        %s121 = smul.addr %s120, 8
        %s122 = scalar_lea.vmem [#allocation2], %s121
        %p123 = pneg %p39
        %p124 = pneg %p36
        %p125 = pneg %p65
        %p126 = pneg %p62
        %s127 = sand.u32 %s52, 1
        %s128 = scalar_lea.sflag [#allocation4], %s127
        %s129 = sand.u32 %s52, 1
        %s130 = smul.addr %s129, 8
        %s131 = scalar_lea.vmem [#allocation5], %s130
        %v132 = vld [vmem:[%s113] sm:$0xff]
        %133 = vadd.xlane.f32.xlu0 %v132
        %v134 = vpop.xlane.xlu0 %133
        %v135 = vrot.slane %v134, 4
        %v136 = vadd.f32 %v134, %v135
        %v137 = vrot.slane %v136, 2
        %v138 = vadd.f32 %v136, %v137
        %v139 = vrot.slane %v138, 1
        %v140 = vadd.f32 %v138, %v139
        %v141 = vmul.f32 %v140, 0.0009765625
        %v142 = vsub.f32 %v132, %v141
        %v143 = vmul.f32 %v142, %v142
        %144 = vadd.xlane.f32.xlu0 %v143
        %v145 = vpop.xlane.xlu0 %144
        %v146 = vrot.slane %v145, 4
        %v147 = vadd.f32 %v145, %v146
        %v148 = vrot.slane %v147, 2
        %v149 = vadd.f32 %v147, %v148
        %v150 = vrot.slane %v149, 1
        %v151 = vadd.f32 %v149, %v150
        %v152 = vmul.f32 %v151, 0.0009775171
        %v153 = vrsqrt.pop %v152
        %v154 = vmul.f32 %v152, %v153
        %vm155 = vcmp.eq.f32.partialorder %v152, inf
        %v156 = vsel %vm155, %v152, %v154
        %vm157 = vcmp.eq.f32.partialorder %v152, 0.0
        %v158 = vand.u32 %v152, 2147483648
        %v159 = vsel %vm157, %v158, %v156
        %v160 = vadd.f32 %v159, 1e-05
        %v161 = vrcp.pop %v160
        %v162 = vmul.f32 %v142, %v161
        %163 = vst [vmem:[%s131] sm:$0xff] %v162
        %s164 = sand.u32 %s52, 1
        %s165 = scalar_lea.sflag [#allocation4], %s164
        %s166 = sand.u32 %s52, 1
        %s167 = smul.addr %s166, 8
        %s168 = scalar_lea.vmem [#allocation5], %s167
        // Predicated region
        $region29: #{tpu_custom_call.1} parent=23 // pred_check
          %p169 = pneg %p62
        $region30: #{tpu_custom_call.1} parent=23 // pred_check_branch
          %171 = sbr.rel (%p169) target = $region32
        $region31: #{tpu_custom_call.1} parent=23 // pred_region
          %s173 = ssub.s32 128, 128
          %174 = vsyncadd %s165, %s173
          %s175 = smul.addr %s18, 128
          %s176 = scalar_lea.hbm %s1, %s175
          %s178 = sshll.u32 %s168, 4
          %s179 = int_to_ptr.vmem [resolvable:$true] %s178
          %181 = dma.vmem_to_hbm [thread:$0]  %s179, 128, %s176, %s165
        $region32: #{tpu_custom_call.1} parent=23 // pred_fallthru
          _
      $region24: #{tpu_custom_call.1} parent=5 // pred_fallthru
        _
      %p182 = scmp.le.s32.totalorder 2, %s13
      // Predicated region
      $region33: #{tpu_custom_call.1} parent=5 // pred_check
        %p183 = pneg %p182
      $region34: #{tpu_custom_call.1} parent=5 // pred_check_branch
        %185 = sbr.rel (%p183) target = $region36
      $region35: #{tpu_custom_call.1} parent=5 // pred_region
        %s186 = ssub.s32 %s13, 2
        // Predicated region
        $region37: #{tpu_custom_call.1} parent=35 // pred_check
          %p187 = pneg %p68
        $region38: #{tpu_custom_call.1} parent=35 // pred_check_branch
          %189 = sbr.rel (%p187) target = $region40
        $region39: #{tpu_custom_call.1} parent=35 // pred_region
          %s190 = sand.u32 %s53, 1
          %s191 = scalar_lea.sflag [#allocation4], %s190
          %s192 = sand.u32 %s53, 1
          %s193 = smul.addr %s192, 8
          %s194 = scalar_lea.vmem [#allocation5], %s193
          %195 = dma.done %s191, 128
        $region40: #{tpu_custom_call.1} parent=35 // pred_fallthru
          _
      $region36: #{tpu_custom_call.1} parent=5 // pred_fallthru
        _
    $region6: #{tpu_custom_call.1} parent=1 // loop_footer
      %s17 = sadd.s32 1, %s13
    $region7: #{tpu_custom_call.1} parent=1 // loop_footer_branch
      %12 = sbr.rel target = $region3
    $region8: #{tpu_custom_call.1} parent=1 // loop_exit
      _
    %196 = vsyncpa [#allocation3], 1
    %s197 = scalar_lea.sflag [#allocation3], 1
    %198 = vsyncpa %s197, 1
    %199 = vsyncpa [#allocation4], 1
    %s200 = scalar_lea.sflag [#allocation4], 1
    %201 = vsyncpa %s200, 1

</llo_original>
